<compile_context>
chip_gen: v7x
topology: tpu7x:2x2x1
jax: 0.10.0
libtpu: 0.0.40
codegen_flags: <defaults>
</compile_context>

<pallas_src>
import functools

import jax
import jax.numpy as jnp
from jax.experimental import pallas as pl
from jax.experimental.pallas import tpu as pltpu


def _project(h, w_t):
    """h @ w_t with explicit precision (bf16 operands, f32 accumulation).

    h: [N, K] (f32 or bf16), w_t: [K, H] bf16.
    K == 1 (e.g. in_channels == 1) would be pure MXU push/pop overhead, so it is
    computed as a VPU broadcast multiply in f32 instead.
    """
    if h.shape[1] == 1:
        return h.astype(jnp.float32) * w_t.astype(jnp.float32)        # [N,1]*[1,H]
    return jnp.dot(h.astype(jnp.bfloat16), w_t,
                   preferred_element_type=jnp.float32)


def _gnn_critic_kernel(x_ref, adj_ref, dinv_ref, pool_ref,
                       w1l_ref, w1r_ref, b1_ref,
                       w2l_ref, w2r_ref, b2_ref,
                       out_ref):
    """One grid step == one independent graph-batch, fully VMEM resident.

    x_ref    [N, Cin]  f32   node features
    adj_ref  [N, N]    bf16  edge counts (adj[i, j] = #edges j->i), exact
    dinv_ref [N, 1]    f32   1 / max(in_degree, 1)
    pool_ref [B, N]    bf16  graph pooling matrix (one-hot rows, exact)
    w1l_ref  [Cin, H]  bf16  W1_l^T      w1r_ref [Cin, H] bf16  W1_r^T
    b1_ref   [1, H]    f32
    w2l_ref  [H, CP]   bf16  W2_l^T (lane-padded)   w2r_ref [H, CP] bf16
    b2_ref   [1, CP]   f32   (lane-padded)
    out_ref  [B, CP]   f32   padded pooled output (slice [:, :Cout] outside)
    """
    f32, bf16 = jnp.float32, jnp.bfloat16
    x = x_ref[...]                              # f32 [N, Cin]
    adj = adj_ref[...]                          # bf16 [N, N]
    dinv = dinv_ref[...]                        # f32 [N, 1]

    # ---- SAGEConv 1: aggregate-first left branch  (A @ x) @ W1_l^T --------
    agg_x = dinv * jnp.dot(adj, x.astype(bf16), preferred_element_type=f32)  # [N,Cin]
    h1 = _project(agg_x, w1l_ref[...]) + _project(x, w1r_ref[...]) + b1_ref[...]
    h1 = jnp.maximum(h1, 0.0)                   # f32 ReLU (VPU)
    h1_bf = h1.astype(bf16)

    # ---- SAGEConv 2: aggregate-first left branch --------------------------
    agg_h = dinv * jnp.dot(adj, h1_bf, preferred_element_type=f32)           # [N, H]
    h2 = (jnp.dot(agg_h.astype(bf16), w2l_ref[...], preferred_element_type=f32)
          + jnp.dot(h1_bf, w2r_ref[...], preferred_element_type=f32)
          + b2_ref[...])                                                     # [N, CP]

    # ---- global_add_pool: unmasked lane-dense store ------------------------
    out_ref[...] = jnp.dot(pool_ref[...], h2.astype(bf16),
                           preferred_element_type=f32)


def prepare_params(params):
    """One-time weight preprocessing (hoisted out of the per-forward path).

    Transposes to [K, H], pads the output width to a 128-lane boundary (so all
    kernel stores are lane-dense), casts MXU operands to bf16 and keeps biases
    in f32 (VPU adds)."""
    w1l, w1r, b1, w2l, w2r, b2 = params
    hidden = w1l.shape[0]
    out_ch = w2l.shape[0]
    cp = 128 * pl.cdiv(out_ch, 128)
    prepared = (
        w1l.T.astype(jnp.bfloat16),                                        # [Cin, H]
        w1r.T.astype(jnp.bfloat16),                                        # [Cin, H]
        b1.reshape(1, hidden).astype(jnp.float32),                         # [1, H]
        jnp.pad(w2l.T, ((0, 0), (0, cp - out_ch))).astype(jnp.bfloat16),   # [H, CP]
        jnp.pad(w2r.T, ((0, 0), (0, cp - out_ch))).astype(jnp.bfloat16),   # [H, CP]
        jnp.pad(b2.reshape(1, out_ch),
                ((0, 0), (0, cp - out_ch))).astype(jnp.float32),           # [1, CP]
    )
    return prepared, out_ch


def _build_graph_tensors(x, edge_index, batch, batch_size):
    """Dense per-graph tensors for the kernel (jit-fused with the call; cache
    when the graph is static).
    TODO(synk): switch to an edge-list + PrefetchScalarGridSpec gather path for
    large N (the dense adjacency costs O(N^2) to build and move)."""
    n = x.shape[0]
    src, dst = edge_index[0], edge_index[1]
    adj = jnp.zeros((n, n), jnp.float32).at[dst, src].add(1.0)   # edge counts j->i
    deg = jnp.sum(adj, axis=1, keepdims=True)
    dinv = 1.0 / jnp.maximum(deg, 1.0)                           # f32 [N, 1]
    pool = (batch[None, :] == jnp.arange(batch_size)[:, None])   # [B, N] one-hot
    return x, adj.astype(jnp.bfloat16), dinv, pool.astype(jnp.bfloat16)


@functools.partial(jax.jit, static_argnames=("batch_size", "out_channels"))
def gnn_critic_forward(x, edge_index, batch, prepared, batch_size, out_channels):
    """Batched forward: G independent graph-batches per pallas_call.

    x:          [G, N, Cin] f32
    edge_index: [G, 2, E]   int32
    batch:      [G, N]      int32 (graph id per node, < batch_size)
    returns     [G, batch_size, out_channels] f32
    """
    xs, adjs, dinvs, pools = jax.vmap(
        lambda xg, eg, bg: _build_graph_tensors(xg, eg, bg, batch_size)
    )(x, edge_index, batch)

    w1l_t, w1r_t, b1, w2l_t, w2r_t, b2 = prepared
    g, n, cin = xs.shape
    b = batch_size
    h = b1.shape[1]
    cp = b2.shape[1]

    def per_graph(shape):   # one graph-batch per grid step, leading axis squeezed
        return pl.BlockSpec((None,) + shape, lambda gi: (gi,) + (0,) * len(shape))

    def shared(shape):      # weights / biases: same (only) block every step
        return pl.BlockSpec(shape, lambda gi: (0,) * len(shape))

    out = pl.pallas_call(
        _gnn_critic_kernel,
        out_shape=jax.ShapeDtypeStruct((g, b, cp), jnp.float32),
        grid_spec=pltpu.PrefetchScalarGridSpec(
            num_scalar_prefetch=0,
            grid=(g,),
            in_specs=[per_graph((n, cin)), per_graph((n, n)),
                      per_graph((n, 1)), per_graph((b, n)),
                      shared((cin, h)), shared((cin, h)), shared((1, h)),
                      shared((h, cp)), shared((h, cp)), shared((1, cp))],
            out_specs=per_graph((b, cp)),
        ),
        compiler_params=pltpu.CompilerParams(
            # Independent graphs: megacore-shardable, pipelined input DMA.
            dimension_semantics=("parallel",),
        ),
    )(xs, adjs, dinvs, pools, w1l_t, w1r_t, b1, w2l_t, w2r_t, b2)

    return out[..., :out_channels]


def gnn_critic_forward_single(x, edge_index, batch, prepared, batch_size, out_channels):
    """Module-signature forward for a single (already node-batched) graph."""
    out = gnn_critic_forward(x[None], edge_index[None], batch[None], prepared,
                             batch_size=batch_size, out_channels=out_channels)
    return out[0]


# ---------------------------------------------------------------------------
# Pure-JAX references for correctness checking (single graph-batch).
# ---------------------------------------------------------------------------

def _reference_forward(x, edge_index, batch, batch_size, params):
    """Exact f32 PyG-equivalent math (original module semantics)."""
    n = x.shape[0]
    src, dst = edge_index[0], edge_index[1]
    adj = jnp.zeros((n, n), jnp.float32).at[dst, src].add(1.0)
    deg = jnp.sum(adj, axis=1, keepdims=True)
    a_mean = adj / jnp.maximum(deg, 1.0)
    pool = (batch[None, :] == jnp.arange(batch_size)[:, None]).astype(jnp.float32)
    w1l, w1r, b1, w2l, w2r, b2 = params
    hi = jax.lax.Precision.HIGHEST
    h1 = jnp.maximum(
        jnp.dot(jnp.dot(a_mean, x, precision=hi), w1l.T, precision=hi)
        + b1 + jnp.dot(x, w1r.T, precision=hi), 0.0)
    h2 = (jnp.dot(jnp.dot(a_mean, h1, precision=hi), w2l.T, precision=hi)
          + b2 + jnp.dot(h1, w2r.T, precision=hi))
    return jnp.dot(pool, h2, precision=hi)


def _reference_forward_mimic(x, edge_index, batch, batch_size, prepared, out_ch):
    """Exactly the kernel's math (bf16 MXU operands, f32 accum) in plain JAX."""
    xg, adj, dinv, pool = _build_graph_tensors(x, edge_index, batch, batch_size)
    w1l_t, w1r_t, b1, w2l_t, w2r_t, b2 = prepared
    f32, bf16 = jnp.float32, jnp.bfloat16
    agg_x = dinv * jnp.dot(adj, xg.astype(bf16), preferred_element_type=f32)
    h1 = jnp.maximum(_project(agg_x, w1l_t) + _project(xg, w1r_t) + b1, 0.0)
    h1_bf = h1.astype(bf16)
    agg_h = dinv * jnp.dot(adj, h1_bf, preferred_element_type=f32)
    h2 = (jnp.dot(agg_h.astype(bf16), w2l_t, preferred_element_type=f32)
          + jnp.dot(h1_bf, w2r_t, preferred_element_type=f32) + b2)
    out = jnp.dot(pool, h2.astype(bf16), preferred_element_type=f32)
    return out[:, :out_ch]


if __name__ == "__main__":
    # Small shapes consistent with the module: in_channels=1, hidden=16, out=1.
    G = 4                        # independent graph-batches fused into ONE call
    N, E, B = 16, 40, 2
    IN_CH, HIDDEN, OUT_CH = 1, 16, 1

    key = jax.random.PRNGKey(0)
    k_x, k_e1, k_e2, k_w1l, k_w1r, k_w2l, k_w2r = jax.random.split(key, 7)

    x = jax.random.normal(k_x, (G, N, IN_CH), jnp.float32)
    edge_index = jnp.stack([
        jax.random.randint(k_e1, (G, E), 0, N),
        jax.random.randint(k_e2, (G, E), 0, N),
    ], axis=1).astype(jnp.int32)                                       # [G, 2, E]
    batch = jnp.tile(jnp.concatenate([jnp.zeros(N // 2, jnp.int32),
                                      jnp.ones(N - N // 2, jnp.int32)]),
                     (G, 1))                                           # [G, N]

    # Deterministic synthetic parameters (PyTorch-style uniform init).
    scale1 = 1.0 / jnp.sqrt(jnp.float32(IN_CH))
    scale2 = 1.0 / jnp.sqrt(jnp.float32(HIDDEN))
    params = (
        jax.random.uniform(k_w1l, (HIDDEN, IN_CH), jnp.float32, -scale1, scale1),
        jax.random.uniform(k_w1r, (HIDDEN, IN_CH), jnp.float32, -scale1, scale1),
        jnp.zeros((HIDDEN,), jnp.float32),
        jax.random.uniform(k_w2l, (OUT_CH, HIDDEN), jnp.float32, -scale2, scale2),
        jax.random.uniform(k_w2r, (OUT_CH, HIDDEN), jnp.float32, -scale2, scale2),
        jnp.zeros((OUT_CH,), jnp.float32),
    )

    prepared, out_ch = prepare_params(params)          # one-time weight prep
    out = gnn_critic_forward(x, edge_index, batch, prepared,
                             batch_size=B, out_channels=out_ch)
    out = jax.block_until_ready(out)
    assert out.shape == (G, B, OUT_CH)

    for g in range(G):
        # 1) Kernel implements the intended (explicit bf16-operand) math exactly.
        mimic = _reference_forward_mimic(x[g], edge_index[g], batch[g], B,
                                         prepared, out_ch)
        assert jnp.allclose(out[g], mimic, atol=2e-2, rtol=2e-2)
        # 2) Kernel matches the original full-f32 module semantics up to bf16
        #    operand rounding (adjacency / pooling one-hots stay exact).
        ref = _reference_forward(x[g], edge_index[g], batch[g], B, params)
        assert jnp.allclose(out[g], ref, atol=2e-1, rtol=1e-1)

    print("KERNEL_OK")
</pallas_src>

<mosaic_0001>
module attributes {stable_mosaic.version = 11 : i64} {
  func.func private @main(%arg0: i32) attributes {dimension_semantics = [#tpu.dimension_semantics<core_parallel>], iteration_bounds = array<i64: 2>, tpu.core_type = #tpu.core_type<sc_scalar_subcore>, window_params = []} {
    return
  }
}

module attributes {stable_mosaic.version = 11 : i64} {
  func.func private @main(%arg0: i32) attributes {dimension_semantics = [#tpu.dimension_semantics<core_parallel>], iteration_bounds = array<i64: 2>, tpu.core_type = #tpu.core_type<sc_scalar_subcore>, window_params = []} {
    return
  }
}

module attributes {stable_mosaic.version = 11 : i64} {
  func.func @_gnn_critic_kernel(%arg0: i32, %arg1: memref<1x16x1xf32, #tpu.memory_space<vmem>>, %arg2: memref<1x16x16xbf16, #tpu.memory_space<vmem>>, %arg3: memref<1x16x1xf32, #tpu.memory_space<vmem>>, %arg4: memref<1x2x16xbf16, #tpu.memory_space<vmem>>, %arg5: memref<1x16xbf16, #tpu.memory_space<vmem>>, %arg6: memref<1x16xbf16, #tpu.memory_space<vmem>>, %arg7: memref<1x16xf32, #tpu.memory_space<vmem>>, %arg8: memref<16x128xbf16, #tpu.memory_space<vmem>>, %arg9: memref<16x128xbf16, #tpu.memory_space<vmem>>, %arg10: memref<1x128xf32, #tpu.memory_space<vmem>>, %arg11: memref<1x2x128xf32, #tpu.memory_space<vmem>>) attributes {dimension_semantics = [#tpu.dimension_semantics<parallel>], iteration_bounds = array<i64: 4>, scalar_prefetch = 0 : i64, scratch_operands = 0 : i64, tpu.core_type = #tpu.core_type<tc>, window_params = [{transform_indices = @transform_0, window_bounds = array<i64: 1, 16, 1>}, {transform_indices = @transform_1, window_bounds = array<i64: 1, 16, 16>}, {transform_indices = @transform_2, window_bounds = array<i64: 1, 16, 1>}, {transform_indices = @transform_3, window_bounds = array<i64: 1, 2, 16>}, {pipeline_mode = #tpu.pipeline_mode<synchronous>, transform_indices = @transform_4, window_bounds = array<i64: 1, 16>}, {pipeline_mode = #tpu.pipeline_mode<synchronous>, transform_indices = @transform_5, window_bounds = array<i64: 1, 16>}, {pipeline_mode = #tpu.pipeline_mode<synchronous>, transform_indices = @transform_6, window_bounds = array<i64: 1, 16>}, {pipeline_mode = #tpu.pipeline_mode<synchronous>, transform_indices = @transform_7, window_bounds = array<i64: 16, 128>}, {pipeline_mode = #tpu.pipeline_mode<synchronous>, transform_indices = @transform_8, window_bounds = array<i64: 16, 128>}, {pipeline_mode = #tpu.pipeline_mode<synchronous>, transform_indices = @transform_9, window_bounds = array<i64: 1, 128>}, {transform_indices = @transform_10, window_bounds = array<i64: 1, 2, 128>}]} {
    %c0 = arith.constant 0 : index
    %c0_0 = arith.constant 0 : index
    %c0_1 = arith.constant 0 : index
    %0 = vector.load %arg1[%c0, %c0_0, %c0_1] : memref<1x16x1xf32, #tpu.memory_space<vmem>>, vector<1x16x1xf32>
    %1 = vector.shape_cast %0 : vector<1x16x1xf32> to vector<16x1xf32>
    %c0_2 = arith.constant 0 : index
    %c0_3 = arith.constant 0 : index
    %c0_4 = arith.constant 0 : index
    %2 = vector.load %arg2[%c0_2, %c0_3, %c0_4] : memref<1x16x16xbf16, #tpu.memory_space<vmem>>, vector<1x16x16xbf16>
    %3 = vector.shape_cast %2 : vector<1x16x16xbf16> to vector<16x16xbf16>
    %c0_5 = arith.constant 0 : index
    %c0_6 = arith.constant 0 : index
    %c0_7 = arith.constant 0 : index
    %4 = vector.load %arg3[%c0_5, %c0_6, %c0_7] : memref<1x16x1xf32, #tpu.memory_space<vmem>>, vector<1x16x1xf32>
    %5 = vector.shape_cast %4 : vector<1x16x1xf32> to vector<16x1xf32>
    %6 = arith.truncf %1 : vector<16x1xf32> to vector<16x1xbf16>
    %cst = arith.constant dense<0.000000e+00> : vector<16x1xf32>
    %7 = tpu.matmul %3, %6, %cst {dimension_numbers = #tpu.dot_dimension_numbers<[1], [0], [0], [1], [0, 0, 1, 1], [], []>} : vector<16x16xbf16>, vector<16x1xbf16>, vector<16x1xf32> -> vector<16x1xf32>
    %8 = arith.mulf %5, %7 : vector<16x1xf32>
    %c0_8 = arith.constant 0 : index
    %c0_9 = arith.constant 0 : index
    %9 = vector.load %arg5[%c0_8, %c0_9] : memref<1x16xbf16, #tpu.memory_space<vmem>>, vector<1x16xbf16>
    %10 = arith.extf %9 : vector<1x16xbf16> to vector<1x16xf32>
    %11 = vector.broadcast %8 : vector<16x1xf32> to vector<16x16xf32>
    %12 = vector.broadcast %10 : vector<1x16xf32> to vector<16x16xf32>
    %13 = arith.mulf %11, %12 : vector<16x16xf32>
    %c0_10 = arith.constant 0 : index
    %c0_11 = arith.constant 0 : index
    %14 = vector.load %arg6[%c0_10, %c0_11] : memref<1x16xbf16, #tpu.memory_space<vmem>>, vector<1x16xbf16>
    %15 = arith.extf %14 : vector<1x16xbf16> to vector<1x16xf32>
    %16 = vector.broadcast %1 : vector<16x1xf32> to vector<16x16xf32>
    %17 = vector.broadcast %15 : vector<1x16xf32> to vector<16x16xf32>
    %18 = arith.mulf %16, %17 : vector<16x16xf32>
    %19 = arith.addf %13, %18 : vector<16x16xf32>
    %c0_12 = arith.constant 0 : index
    %c0_13 = arith.constant 0 : index
    %20 = vector.load %arg7[%c0_12, %c0_13] : memref<1x16xf32, #tpu.memory_space<vmem>>, vector<1x16xf32>
    %21 = vector.broadcast %20 : vector<1x16xf32> to vector<16x16xf32>
    %22 = arith.addf %19, %21 : vector<16x16xf32>
    %cst_14 = arith.constant 0.000000e+00 : f32
    %23 = vector.broadcast %cst_14 : f32 to vector<16x16xf32>
    %24 = arith.maximumf %22, %23 : vector<16x16xf32>
    %25 = arith.truncf %24 : vector<16x16xf32> to vector<16x16xbf16>
    %cst_15 = arith.constant dense<0.000000e+00> : vector<16x16xf32>
    %26 = tpu.matmul %3, %25, %cst_15 {dimension_numbers = #tpu.dot_dimension_numbers<[1], [0], [0], [1], [0, 0, 1, 1], [], []>} : vector<16x16xbf16>, vector<16x16xbf16>, vector<16x16xf32> -> vector<16x16xf32>
    %27 = vector.broadcast %5 : vector<16x1xf32> to vector<16x16xf32>
    %28 = arith.mulf %27, %26 : vector<16x16xf32>
    %29 = arith.truncf %28 : vector<16x16xf32> to vector<16x16xbf16>
    %c0_16 = arith.constant 0 : index
    %c0_17 = arith.constant 0 : index
    %30 = vector.load %arg8[%c0_16, %c0_17] : memref<16x128xbf16, #tpu.memory_space<vmem>>, vector<16x128xbf16>
    %cst_18 = arith.constant dense<0.000000e+00> : vector<16x128xf32>
    %31 = tpu.matmul %29, %30, %cst_18 {dimension_numbers = #tpu.dot_dimension_numbers<[1], [0], [0], [1], [0, 0, 1, 1], [], []>} : vector<16x16xbf16>, vector<16x128xbf16>, vector<16x128xf32> -> vector<16x128xf32>
    %c0_19 = arith.constant 0 : index
    %c0_20 = arith.constant 0 : index
    %32 = vector.load %arg9[%c0_19, %c0_20] : memref<16x128xbf16, #tpu.memory_space<vmem>>, vector<16x128xbf16>
    %cst_21 = arith.constant dense<0.000000e+00> : vector<16x128xf32>
    %33 = tpu.matmul %25, %32, %cst_21 {dimension_numbers = #tpu.dot_dimension_numbers<[1], [0], [0], [1], [0, 0, 1, 1], [], []>} : vector<16x16xbf16>, vector<16x128xbf16>, vector<16x128xf32> -> vector<16x128xf32>
    %34 = arith.addf %31, %33 : vector<16x128xf32>
    %c0_22 = arith.constant 0 : index
    %c0_23 = arith.constant 0 : index
    %35 = vector.load %arg10[%c0_22, %c0_23] : memref<1x128xf32, #tpu.memory_space<vmem>>, vector<1x128xf32>
    %36 = vector.broadcast %35 : vector<1x128xf32> to vector<16x128xf32>
    %37 = arith.addf %34, %36 : vector<16x128xf32>
    %c0_24 = arith.constant 0 : index
    %c0_25 = arith.constant 0 : index
    %c0_26 = arith.constant 0 : index
    %38 = vector.load %arg4[%c0_24, %c0_25, %c0_26] : memref<1x2x16xbf16, #tpu.memory_space<vmem>>, vector<1x2x16xbf16>
    %39 = vector.shape_cast %38 : vector<1x2x16xbf16> to vector<2x16xbf16>
    %40 = arith.truncf %37 : vector<16x128xf32> to vector<16x128xbf16>
    %cst_27 = arith.constant dense<0.000000e+00> : vector<2x128xf32>
    %41 = tpu.matmul %39, %40, %cst_27 {dimension_numbers = #tpu.dot_dimension_numbers<[1], [0], [0], [1], [0, 0, 1, 1], [], []>} : vector<2x16xbf16>, vector<16x128xbf16>, vector<2x128xf32> -> vector<2x128xf32>
    %c0_28 = arith.constant 0 : index
    %c0_29 = arith.constant 0 : index
    %c0_30 = arith.constant 0 : index
    %42 = vector.load %arg11[%c0_28, %c0_29, %c0_30] : memref<1x2x128xf32, #tpu.memory_space<vmem>>, vector<1x2x128xf32>
    %43 = vector.shape_cast %42 : vector<1x2x128xf32> to vector<2x128xf32>
    %44 = vector.shape_cast %41 : vector<2x128xf32> to vector<1x2x128xf32>
    tpu.vector_store %arg11[%c0_28, %c0_29, %c0_30], %44 {strides = array<i32>} : memref<1x2x128xf32, #tpu.memory_space<vmem>>, vector<1x2x128xf32>,
    return
  }
  func.func @transform_0(%arg0: i32) -> (i32, i32, i32) {
    %c0_i32 = arith.constant 0 : i32
    %c0_i32_0 = arith.constant 0 : i32
    %c0_i32_1 = arith.constant 0 : i32
    return %arg0, %c0_i32, %c0_i32_0 : i32, i32, i32
  }
  func.func @transform_1(%arg0: i32) -> (i32, i32, i32) {
    %c0_i32 = arith.constant 0 : i32
    %c0_i32_0 = arith.constant 0 : i32
    %c0_i32_1 = arith.constant 0 : i32
    return %arg0, %c0_i32, %c0_i32_0 : i32, i32, i32
  }
  func.func @transform_2(%arg0: i32) -> (i32, i32, i32) {
    %c0_i32 = arith.constant 0 : i32
    %c0_i32_0 = arith.constant 0 : i32
    %c0_i32_1 = arith.constant 0 : i32
    return %arg0, %c0_i32, %c0_i32_0 : i32, i32, i32
  }
  func.func @transform_3(%arg0: i32) -> (i32, i32, i32) {
    %c0_i32 = arith.constant 0 : i32
    %c0_i32_0 = arith.constant 0 : i32
    %c0_i32_1 = arith.constant 0 : i32
    return %arg0, %c0_i32, %c0_i32_0 : i32, i32, i32
  }
  func.func @transform_4(%arg0: i32) -> (i32, i32) {
    %c0_i32 = arith.constant 0 : i32
    %c0_i32_0 = arith.constant 0 : i32
    %c0_i32_1 = arith.constant 0 : i32
    return %c0_i32, %c0_i32_0 : i32, i32
  }
  func.func @transform_5(%arg0: i32) -> (i32, i32) {
    %c0_i32 = arith.constant 0 : i32
    %c0_i32_0 = arith.constant 0 : i32
    %c0_i32_1 = arith.constant 0 : i32
    return %c0_i32, %c0_i32_0 : i32, i32
  }
  func.func @transform_6(%arg0: i32) -> (i32, i32) {
    %c0_i32 = arith.constant 0 : i32
    %c0_i32_0 = arith.constant 0 : i32
    %c0_i32_1 = arith.constant 0 : i32
    return %c0_i32, %c0_i32_0 : i32, i32
  }
  func.func @transform_7(%arg0: i32) -> (i32, i32) {
    %c0_i32 = arith.constant 0 : i32
    %c0_i32_0 = arith.constant 0 : i32
    %c0_i32_1 = arith.constant 0 : i32
    return %c0_i32, %c0_i32_0 : i32, i32
  }
  func.func @transform_8(%arg0: i32) -> (i32, i32) {
    %c0_i32 = arith.constant 0 : i32
    %c0_i32_0 = arith.constant 0 : i32
    %c0_i32_1 = arith.constant 0 : i32
    return %c0_i32, %c0_i32_0 : i32, i32
  }
  func.func @transform_9(%arg0: i32) -> (i32, i32) {
    %c0_i32 = arith.constant 0 : i32
    %c0_i32_0 = arith.constant 0 : i32
    %c0_i32_1 = arith.constant 0 : i32
    return %c0_i32, %c0_i32_0 : i32, i32
  }
  func.func @transform_10(%arg0: i32) -> (i32, i32, i32) {
    %c0_i32 = arith.constant 0 : i32
    %c0_i32_0 = arith.constant 0 : i32
    %c0_i32_1 = arith.constant 0 : i32
    return %arg0, %c0_i32, %c0_i32_0 : i32, i32, i32
  }
}

</mosaic_0001>

<llo_original>
// kernel: gnn_critic_forward.1
$region0: #{gnn_critic_forward.1}
  #allocation0 [shape = 'u32[]', space=smem, size = 0x4, offset = 0x4, fixed_abs, tag = 'smem constant byte address 0x4 - core index']
  #allocation1 [shape = 'u32[144,128]{1,0:T(1,128)}', space=vmem, size = 0x12000, scoped, tag = 'internal scratch']
  %s0 = inlined_call_operand.vmem [shape: f32[4,16,1], index: 0, kind: input, shape index: {}]
  %s1 = inlined_call_operand.vmem [shape: bf16[4,16,16], index: 1, kind: input, shape index: {}]
  %s2 = inlined_call_operand.vmem [shape: f32[4,16,1], index: 2, kind: input, shape index: {}]
  %s3 = inlined_call_operand.vmem [shape: bf16[4,2,16], index: 3, kind: input, shape index: {}]
  %s4 = inlined_call_operand.vmem [shape: bf16[1,16], index: 4, kind: input, shape index: {}]
  %s5 = inlined_call_operand.vmem [shape: bf16[1,16], index: 5, kind: input, shape index: {}]
  %s6 = inlined_call_operand.vmem [shape: f32[1,16], index: 6, kind: input, shape index: {}]
  %s7 = inlined_call_operand.vmem [shape: bf16[16,128], index: 7, kind: input, shape index: {}]
  %s8 = inlined_call_operand.vmem [shape: bf16[16,128], index: 8, kind: input, shape index: {}]
  %s9 = inlined_call_operand.vmem [shape: f32[1,128], index: 9, kind: input, shape index: {}]
  %s10 = inlined_call_operand.vmem [shape: f32[4,2,128], index: 10, kind: output, shape index: {}]
  %s11 = sld [smem:[#allocation0]]
  $region73: #{gnn_critic_forward.1} parent=0
    _
  %s13 = ssub.s32 1, %s11
  %s14 = scalar_select 0, %s13, %s11
  loop: start=0, step=1, limit=6
  $region2: #{gnn_critic_forward.1} parent=0 // loop_pre_header
    _
  $region3: #{gnn_critic_forward.1} parent=0 // loop_header
    %s16 = sphi 0, %s20
    %p17 = scmp.ge.s32.totalorder %s16, 6
    %s26 = sphi 0, %s28
    %s29 = sphi 0, %s26
    %s30 = sphi 0, %s29
    %s46 = sphi 0, %s30
    %s52 = sphi 0, %s54
    %s55 = sphi 0, %s52
    %s56 = sphi 0, %s55
    %s72 = sphi 0, %s56
    %s78 = sphi 0, %s80
    %s81 = sphi 0, %s78
    %s82 = sphi 0, %s81
    %s98 = sphi 0, %s82
    %s104 = sphi 0, %s106
    %s107 = sphi 0, %s104
    %s108 = sphi 0, %s107
    %s124 = sphi 0, %s108
    %s128 = sphi 0, %s128
    %s130 = sphi 0, %s128
    %s131 = sphi 0, %s130
    %s145 = sphi 0, %s131
    %s149 = sphi 0, %s149
    %s151 = sphi 0, %s149
    %s152 = sphi 0, %s151
    %s166 = sphi 0, %s152
    %s170 = sphi 0, %s170
    %s172 = sphi 0, %s170
    %s173 = sphi 0, %s172
    %s187 = sphi 0, %s173
    %s191 = sphi 0, %s191
    %s193 = sphi 0, %s191
    %s194 = sphi 0, %s193
    %s208 = sphi 0, %s194
    %s212 = sphi 0, %s212
    %s214 = sphi 0, %s212
    %s215 = sphi 0, %s214
    %s229 = sphi 0, %s215
    %s233 = sphi 0, %s233
    %s235 = sphi 0, %s233
    %s236 = sphi 0, %s235
    %s250 = sphi 0, %s236
    %s256 = sphi 0, %s258
    %s259 = sphi 0, %s256
    %s260 = sphi 0, %s259
    %s276 = sphi 0, %s260
  $region4: #{gnn_critic_forward.1} parent=0 // loop_header_branch
    %19 = sbr.rel (%p17) target = $region8
  $region5: #{gnn_critic_forward.1} parent=0 // loop_body
    %s21 = ssub.s32 %s16, 1
    %s22 = ssub.s32 %s16, 2
    %s23 = sadd.s32 %s16, 1
    %s24 = ssub.s32 %s16, %s23
    %p25 = scmp.eq.s32.totalorder %s24, 0
    %s27 = sadd.s32 %s26, 1
    %s28 = scalar_select %p25, %s26, %s27
    %p31 = pneg %p25
    %p32 = scmp.eq.s32.totalorder %s16, 3
    %p33 = por %p31, %p32
    %p34 = scmp.ne.s32.totalorder %s26, %s29
    %p35 = scmp.eq.s32.totalorder %s16, 0
    %p36 = por %p34, %p35
    %p37 = scmp.ne.s32.totalorder %s26, %s29
    %p38 = scmp.eq.s32.totalorder %s21, 3
    %p39 = por %p37, %p38
    %p40 = scmp.ne.s32.totalorder %s29, %s30
    %p41 = scmp.eq.s32.totalorder %s21, 0
    %p42 = por %p40, %p41
    %p43 = scmp.ne.s32.totalorder %s29, %s30
    %p44 = scmp.eq.s32.totalorder %s22, 3
    %p45 = por %p43, %p44
    %p47 = scmp.ne.s32.totalorder %s30, %s46
    %p48 = scmp.eq.s32.totalorder %s22, 0
    %p49 = por %p47, %p48
    %s50 = ssub.s32 %s16, %s23
    %p51 = scmp.eq.s32.totalorder %s50, 0
    %s53 = sadd.s32 %s52, 1
    %s54 = scalar_select %p51, %s52, %s53
    %p57 = pneg %p51
    %p58 = scmp.eq.s32.totalorder %s16, 3
    %p59 = por %p57, %p58
    %p60 = scmp.ne.s32.totalorder %s52, %s55
    %p61 = scmp.eq.s32.totalorder %s16, 0
    %p62 = por %p60, %p61
    %p63 = scmp.ne.s32.totalorder %s52, %s55
    %p64 = scmp.eq.s32.totalorder %s21, 3
    %p65 = por %p63, %p64
    %p66 = scmp.ne.s32.totalorder %s55, %s56
    %p67 = scmp.eq.s32.totalorder %s21, 0
    %p68 = por %p66, %p67
    %p69 = scmp.ne.s32.totalorder %s55, %s56
    %p70 = scmp.eq.s32.totalorder %s22, 3
    %p71 = por %p69, %p70
    %p73 = scmp.ne.s32.totalorder %s56, %s72
    %p74 = scmp.eq.s32.totalorder %s22, 0
    %p75 = por %p73, %p74
    %s76 = ssub.s32 %s16, %s23
    %p77 = scmp.eq.s32.totalorder %s76, 0
    %s79 = sadd.s32 %s78, 1
    %s80 = scalar_select %p77, %s78, %s79
    %p83 = pneg %p77
    %p84 = scmp.eq.s32.totalorder %s16, 3
    %p85 = por %p83, %p84
    %p86 = scmp.ne.s32.totalorder %s78, %s81
    %p87 = scmp.eq.s32.totalorder %s16, 0
    %p88 = por %p86, %p87
    %p89 = scmp.ne.s32.totalorder %s78, %s81
    %p90 = scmp.eq.s32.totalorder %s21, 3
    %p91 = por %p89, %p90
    %p92 = scmp.ne.s32.totalorder %s81, %s82
    %p93 = scmp.eq.s32.totalorder %s21, 0
    %p94 = por %p92, %p93
    %p95 = scmp.ne.s32.totalorder %s81, %s82
    %p96 = scmp.eq.s32.totalorder %s22, 3
    %p97 = por %p95, %p96
    %p99 = scmp.ne.s32.totalorder %s82, %s98
    %p100 = scmp.eq.s32.totalorder %s22, 0
    %p101 = por %p99, %p100
    %s102 = ssub.s32 %s16, %s23
    %p103 = scmp.eq.s32.totalorder %s102, 0
    %s105 = sadd.s32 %s104, 1
    %s106 = scalar_select %p103, %s104, %s105
    %p109 = pneg %p103
    %p110 = scmp.eq.s32.totalorder %s16, 3
    %p111 = por %p109, %p110
    %p112 = scmp.ne.s32.totalorder %s104, %s107
    %p113 = scmp.eq.s32.totalorder %s16, 0
    %p114 = por %p112, %p113
    %p115 = scmp.ne.s32.totalorder %s104, %s107
    %p116 = scmp.eq.s32.totalorder %s21, 3
    %p117 = por %p115, %p116
    %p118 = scmp.ne.s32.totalorder %s107, %s108
    %p119 = scmp.eq.s32.totalorder %s21, 0
    %p120 = por %p118, %p119
    %p121 = scmp.ne.s32.totalorder %s107, %s108
    %p122 = scmp.eq.s32.totalorder %s22, 3
    %p123 = por %p121, %p122
    %p125 = scmp.ne.s32.totalorder %s108, %s124
    %p126 = scmp.eq.s32.totalorder %s22, 0
    %p127 = por %p125, %p126
    %s129 = sadd.s32 %s128, 1
    %p132 = scmp.eq.s32.totalorder %s16, 3
    %p133 = scmp.ne.s32.totalorder %s128, %s130
    %p134 = scmp.eq.s32.totalorder %s16, 0
    %p135 = por %p133, %p134
    %p136 = scmp.ne.s32.totalorder %s128, %s130
    %p137 = scmp.eq.s32.totalorder %s21, 3
    %p138 = por %p136, %p137
    %p139 = scmp.ne.s32.totalorder %s130, %s131
    %p140 = scmp.eq.s32.totalorder %s21, 0
    %p141 = por %p139, %p140
    %p142 = scmp.ne.s32.totalorder %s130, %s131
    %p143 = scmp.eq.s32.totalorder %s22, 3
    %p144 = por %p142, %p143
    %p146 = scmp.ne.s32.totalorder %s131, %s145
    %p147 = scmp.eq.s32.totalorder %s22, 0
    %p148 = por %p146, %p147
    %s150 = sadd.s32 %s149, 1
    %p153 = scmp.eq.s32.totalorder %s16, 3
    %p154 = scmp.ne.s32.totalorder %s149, %s151
    %p155 = scmp.eq.s32.totalorder %s16, 0
    %p156 = por %p154, %p155
    %p157 = scmp.ne.s32.totalorder %s149, %s151
    %p158 = scmp.eq.s32.totalorder %s21, 3
    %p159 = por %p157, %p158
    %p160 = scmp.ne.s32.totalorder %s151, %s152
    %p161 = scmp.eq.s32.totalorder %s21, 0
    %p162 = por %p160, %p161
    %p163 = scmp.ne.s32.totalorder %s151, %s152
    %p164 = scmp.eq.s32.totalorder %s22, 3
    %p165 = por %p163, %p164
    %p167 = scmp.ne.s32.totalorder %s152, %s166
    %p168 = scmp.eq.s32.totalorder %s22, 0
    %p169 = por %p167, %p168
    %s171 = sadd.s32 %s170, 1
    %p174 = scmp.eq.s32.totalorder %s16, 3
    %p175 = scmp.ne.s32.totalorder %s170, %s172
    %p176 = scmp.eq.s32.totalorder %s16, 0
    %p177 = por %p175, %p176
    %p178 = scmp.ne.s32.totalorder %s170, %s172
    %p179 = scmp.eq.s32.totalorder %s21, 3
    %p180 = por %p178, %p179
    %p181 = scmp.ne.s32.totalorder %s172, %s173
    %p182 = scmp.eq.s32.totalorder %s21, 0
    %p183 = por %p181, %p182
    %p184 = scmp.ne.s32.totalorder %s172, %s173
    %p185 = scmp.eq.s32.totalorder %s22, 3
    %p186 = por %p184, %p185
    %p188 = scmp.ne.s32.totalorder %s173, %s187
    %p189 = scmp.eq.s32.totalorder %s22, 0
    %p190 = por %p188, %p189
    %s192 = sadd.s32 %s191, 1
    %p195 = scmp.eq.s32.totalorder %s16, 3
    %p196 = scmp.ne.s32.totalorder %s191, %s193
    %p197 = scmp.eq.s32.totalorder %s16, 0
    %p198 = por %p196, %p197
    %p199 = scmp.ne.s32.totalorder %s191, %s193
    %p200 = scmp.eq.s32.totalorder %s21, 3
    %p201 = por %p199, %p200
    %p202 = scmp.ne.s32.totalorder %s193, %s194
    %p203 = scmp.eq.s32.totalorder %s21, 0
    %p204 = por %p202, %p203
    %p205 = scmp.ne.s32.totalorder %s193, %s194
    %p206 = scmp.eq.s32.totalorder %s22, 3
    %p207 = por %p205, %p206
    %p209 = scmp.ne.s32.totalorder %s194, %s208
    %p210 = scmp.eq.s32.totalorder %s22, 0
    %p211 = por %p209, %p210
    %s213 = sadd.s32 %s212, 1
    %p216 = scmp.eq.s32.totalorder %s16, 3
    %p217 = scmp.ne.s32.totalorder %s212, %s214
    %p218 = scmp.eq.s32.totalorder %s16, 0
    %p219 = por %p217, %p218
    %p220 = scmp.ne.s32.totalorder %s212, %s214
    %p221 = scmp.eq.s32.totalorder %s21, 3
    %p222 = por %p220, %p221
    %p223 = scmp.ne.s32.totalorder %s214, %s215
    %p224 = scmp.eq.s32.totalorder %s21, 0
    %p225 = por %p223, %p224
    %p226 = scmp.ne.s32.totalorder %s214, %s215
    %p227 = scmp.eq.s32.totalorder %s22, 3
    %p228 = por %p226, %p227
    %p230 = scmp.ne.s32.totalorder %s215, %s229
    %p231 = scmp.eq.s32.totalorder %s22, 0
    %p232 = por %p230, %p231
    %s234 = sadd.s32 %s233, 1
    %p237 = scmp.eq.s32.totalorder %s16, 3
    %p238 = scmp.ne.s32.totalorder %s233, %s235
    %p239 = scmp.eq.s32.totalorder %s16, 0
    %p240 = por %p238, %p239
    %p241 = scmp.ne.s32.totalorder %s233, %s235
    %p242 = scmp.eq.s32.totalorder %s21, 3
    %p243 = por %p241, %p242
    %p244 = scmp.ne.s32.totalorder %s235, %s236
    %p245 = scmp.eq.s32.totalorder %s21, 0
    %p246 = por %p244, %p245
    %p247 = scmp.ne.s32.totalorder %s235, %s236
    %p248 = scmp.eq.s32.totalorder %s22, 3
    %p249 = por %p247, %p248
    %p251 = scmp.ne.s32.totalorder %s236, %s250
    %p252 = scmp.eq.s32.totalorder %s22, 0
    %p253 = por %p251, %p252
    %s254 = ssub.s32 %s16, %s23
    %p255 = scmp.eq.s32.totalorder %s254, 0
    %s257 = sadd.s32 %s256, 1
    %s258 = scalar_select %p255, %s256, %s257
    %p261 = pneg %p255
    %p262 = scmp.eq.s32.totalorder %s16, 3
    %p263 = por %p261, %p262
    %p264 = scmp.ne.s32.totalorder %s256, %s259
    %p265 = scmp.eq.s32.totalorder %s16, 0
    %p266 = por %p264, %p265
    %p267 = scmp.ne.s32.totalorder %s256, %s259
    %p268 = scmp.eq.s32.totalorder %s21, 3
    %p269 = por %p267, %p268
    %p270 = scmp.ne.s32.totalorder %s259, %s260
    %p271 = scmp.eq.s32.totalorder %s21, 0
    %p272 = por %p270, %p271
    %p273 = scmp.ne.s32.totalorder %s259, %s260
    %p274 = scmp.eq.s32.totalorder %s22, 3
    %p275 = por %p273, %p274
    %p277 = scmp.ne.s32.totalorder %s260, %s276
    %p278 = scmp.eq.s32.totalorder %s22, 0
    %p279 = por %p277, %p278
    %p280 = scmp.le.s32.totalorder 1, %s16
    %p281 = scmp.lt.s32.totalorder %s16, 5
    %p282 = pnand %p280, %p281
    %p283 = pneg %p282
    // Predicated region
    $region9: #{gnn_critic_forward.1} parent=5 // pred_check
      _
    $region10: #{gnn_critic_forward.1} parent=5 // pred_check_branch
      %285 = sbr.rel (%p282) target = $region12
    $region11: #{gnn_critic_forward.1} parent=5 // pred_region
      %s286 = ssub.s32 %s16, 1
      // Predicated region
      $region13: #{gnn_critic_forward.1} parent=11 // pred_check
        %p287 = pneg %p141
      $region14: #{gnn_critic_forward.1} parent=11 // pred_check_branch
        %289 = sbr.rel (%p287) target = $region16
      $region15: #{gnn_critic_forward.1} parent=11 // pred_region
        _
      $region16: #{gnn_critic_forward.1} parent=11 // pred_fallthru
        _
      // Predicated region
      $region17: #{gnn_critic_forward.1} parent=11 // pred_check
        %p290 = pneg %p162
      $region18: #{gnn_critic_forward.1} parent=11 // pred_check_branch
        %292 = sbr.rel (%p290) target = $region20
      $region19: #{gnn_critic_forward.1} parent=11 // pred_region
        _
      $region20: #{gnn_critic_forward.1} parent=11 // pred_fallthru
        _
      // Predicated region
      $region21: #{gnn_critic_forward.1} parent=11 // pred_check
        %p293 = pneg %p183
      $region22: #{gnn_critic_forward.1} parent=11 // pred_check_branch
        %295 = sbr.rel (%p293) target = $region24
      $region23: #{gnn_critic_forward.1} parent=11 // pred_region
        _
      $region24: #{gnn_critic_forward.1} parent=11 // pred_fallthru
        _
      // Predicated region
      $region25: #{gnn_critic_forward.1} parent=11 // pred_check
        %p296 = pneg %p204
      $region26: #{gnn_critic_forward.1} parent=11 // pred_check_branch
        %298 = sbr.rel (%p296) target = $region28
      $region27: #{gnn_critic_forward.1} parent=11 // pred_region
        _
      $region28: #{gnn_critic_forward.1} parent=11 // pred_fallthru
        _
      // Predicated region
      $region29: #{gnn_critic_forward.1} parent=11 // pred_check
        %p299 = pneg %p225
      $region30: #{gnn_critic_forward.1} parent=11 // pred_check_branch
        %301 = sbr.rel (%p299) target = $region32
      $region31: #{gnn_critic_forward.1} parent=11 // pred_region
        _
      $region32: #{gnn_critic_forward.1} parent=11 // pred_fallthru
        _
      // Predicated region
      $region33: #{gnn_critic_forward.1} parent=11 // pred_check
        %p302 = pneg %p246
      $region34: #{gnn_critic_forward.1} parent=11 // pred_check_branch
        %304 = sbr.rel (%p302) target = $region36
      $region35: #{gnn_critic_forward.1} parent=11 // pred_region
        _
      $region36: #{gnn_critic_forward.1} parent=11 // pred_fallthru
        _
    $region12: #{gnn_critic_forward.1} parent=5 // pred_fallthru
      _
    %p305 = scmp.lt.s32.totalorder %s16, 4
    // Predicated region
    $region37: #{gnn_critic_forward.1} parent=5 // pred_check
      %p306 = pneg %p305
    $region38: #{gnn_critic_forward.1} parent=5 // pred_check_branch
      %308 = sbr.rel (%p306) target = $region40
    $region39: #{gnn_critic_forward.1} parent=5 // pred_region
      // Predicated region
      $region41: #{gnn_critic_forward.1} parent=39 // pred_check
        %p309 = pneg %p36
      $region42: #{gnn_critic_forward.1} parent=39 // pred_check_branch
        %311 = sbr.rel (%p309) target = $region44
      $region43: #{gnn_critic_forward.1} parent=39 // pred_region
        %p312 = scmp.lt.s32.totalorder %s16, 3
        %s313 = scalar_select %p312, %s16, 3
        %s314 = smul.addr %s313, 2
        %s315 = smul.addr %s314, 8
        %s316 = scalar_lea.vmem %s0, %s315
      $region44: #{gnn_critic_forward.1} parent=39 // pred_fallthru
        _
      // Predicated region
      $region45: #{gnn_critic_forward.1} parent=39 // pred_check
        %p317 = pneg %p62
      $region46: #{gnn_critic_forward.1} parent=39 // pred_check_branch
        %319 = sbr.rel (%p317) target = $region48
      $region47: #{gnn_critic_forward.1} parent=39 // pred_region
        %p320 = scmp.lt.s32.totalorder %s16, 3
        %s321 = scalar_select %p320, %s16, 3
        %s322 = smul.addr %s321, 2
        %s323 = smul.addr %s322, 4
        %s324 = scalar_lea.vmem %s1, %s323
      $region48: #{gnn_critic_forward.1} parent=39 // pred_fallthru
        _
      // Predicated region
      $region49: #{gnn_critic_forward.1} parent=39 // pred_check
        %p325 = pneg %p88
      $region50: #{gnn_critic_forward.1} parent=39 // pred_check_branch
        %327 = sbr.rel (%p325) target = $region52
      $region51: #{gnn_critic_forward.1} parent=39 // pred_region
        %p328 = scmp.lt.s32.totalorder %s16, 3
        %s329 = scalar_select %p328, %s16, 3
        %s330 = smul.addr %s329, 2
        %s331 = smul.addr %s330, 8
        %s332 = scalar_lea.vmem %s2, %s331
      $region52: #{gnn_critic_forward.1} parent=39 // pred_fallthru
        _
      // Predicated region
      $region53: #{gnn_critic_forward.1} parent=39 // pred_check
        %p333 = pneg %p114
      $region54: #{gnn_critic_forward.1} parent=39 // pred_check_branch
        %335 = sbr.rel (%p333) target = $region56
      $region55: #{gnn_critic_forward.1} parent=39 // pred_region
        %p336 = scmp.lt.s32.totalorder %s16, 3
        %s337 = scalar_select %p336, %s16, 3
        %s338 = scalar_lea.vmem %s3, %s337
      $region56: #{gnn_critic_forward.1} parent=39 // pred_fallthru
        _
    $region40: #{gnn_critic_forward.1} parent=5 // pred_fallthru
      _
    %p339 = scmp.le.s32.totalorder 1, %s16
    %p340 = scmp.lt.s32.totalorder %s16, 5
    %p341 = pnand %p339, %p340
    %p342 = pneg %p341
    // Predicated region
    $region57: #{gnn_critic_forward.1} parent=5 // pred_check
      _
    $region58: #{gnn_critic_forward.1} parent=5 // pred_check_branch
      %344 = sbr.rel (%p341) target = $region60
    $region59: #{gnn_critic_forward.1} parent=5 // pred_region
      %s345 = ssub.s32 %s16, 1
      %p346 = scmp.lt.s32.totalorder %s21, 3
      %s347 = scalar_select %p346, %s21, 3
      %s348 = smul.addr %s347, 2
      %s349 = smul.addr %s348, 8
      %s350 = scalar_lea.vmem %s0, %s349
      %p351 = pneg %p42
      %p352 = pneg %p39
      %p353 = scmp.lt.s32.totalorder %s21, 3
      %s354 = scalar_select %p353, %s21, 3
      %s355 = smul.addr %s354, 2
      %s356 = smul.addr %s355, 4
      %s357 = scalar_lea.vmem %s1, %s356
      %p358 = pneg %p68
      %p359 = pneg %p65
      %p360 = scmp.lt.s32.totalorder %s21, 3
      %s361 = scalar_select %p360, %s21, 3
      %s362 = smul.addr %s361, 2
      %s363 = smul.addr %s362, 8
      %s364 = scalar_lea.vmem %s2, %s363
      %p365 = pneg %p94
      %p366 = pneg %p91
      %p367 = scmp.lt.s32.totalorder %s21, 3
      %s368 = scalar_select %p367, %s21, 3
      %s369 = scalar_lea.vmem %s3, %s368
      %p370 = pneg %p120
      %p371 = pneg %p117
      %p372 = pneg %p141
      %p373 = pneg %p138
      %p374 = pneg %p162
      %p375 = pneg %p159
      %p376 = pneg %p183
      %p377 = pneg %p180
      %p378 = pneg %p204
      %p379 = pneg %p201
      %p380 = pneg %p225
      %p381 = pneg %p222
      %p382 = pneg %p246
      %p383 = pneg %p243
      %p384 = pneg %p272
      %p385 = pneg %p269
      %p386 = scmp.lt.s32.totalorder %s21, 3
      %s387 = scalar_select %p386, %s21, 3
      %s388 = smul.addr %s387, 2
      %s389 = scalar_lea.vmem %s10, %s388
      %p390 = scmp.lt.s32.totalorder %s21, 3
      %s391 = scalar_select %p390, %s21, 3
      %s392 = smul.addr %s391, 2
      %s393 = smul.addr %s392, 8
      %s394 = scalar_lea.vmem %s0, %s393
      %p395 = scmp.lt.s32.totalorder %s21, 3
      %s396 = scalar_select %p395, %s21, 3
      %s397 = smul.addr %s396, 2
      %s398 = smul.addr %s397, 4
      %s399 = scalar_lea.vmem %s1, %s398
      %p400 = scmp.lt.s32.totalorder %s21, 3
      %s401 = scalar_select %p400, %s21, 3
      %s402 = smul.addr %s401, 2
      %s403 = smul.addr %s402, 8
      %s404 = scalar_lea.vmem %s2, %s403
      %p405 = scmp.lt.s32.totalorder %s21, 3
      %s406 = scalar_select %p405, %s21, 3
      %s407 = scalar_lea.vmem %s3, %s406
      %p408 = scmp.lt.s32.totalorder %s21, 3
      %s409 = scalar_select %p408, %s21, 3
      %s410 = smul.addr %s409, 2
      %s411 = scalar_lea.vmem %s10, %s410
      %v413 = vld [vmem:[%s394] sm:$0xff]
      %v414 = vld [vmem:[%s394 + $0x8] sm:$0xff]
      %v415 = vld [vmem:[%s399] sm:$0xf]
      %v416 = vld [vmem:[%s399 + $0x4] sm:$0xf]
      %v417 = vld [vmem:[%s404] sm:$0xff]
      %v418 = vld [vmem:[%s404 + $0x8] sm:$0xff]
      %v419 = vpack.c.bf16 %v414, %v413
      %v422 = vunpack.c.l.b16 %v415
      %v423 = vunpack.c.l.b16 %v416
      %v424 = vpack.c.b16 %v423, %v422
      %vm425 = vcmask 130048
      %v427 = vsel %vm425, %v424, 0
      %429 = vmatprep.subr.bf16.mxu0 0
      %430 = vmatpush1.bf16.msra.mxu0 %v419
      %431 = vmatprep.subr.bf16.mxu0 0
      %432 = vmatpush1.bf16.msra.mxu0 0
      %433 = vmatprep.subr.bf16.mxu0 0
      %434 = vmatpush1.bf16.msra.mxu0 0
      %435 = vmatprep.subr.bf16.mxu0 0
      %436 = vmatpush1.bf16.msra.mxu0 0
      %437 = vmatprep.subr.bf16.mxu0 0
      %438 = vmatpush1.bf16.msra.mxu0 0
      %439 = vmatprep.subr.bf16.mxu0 0
      %440 = vmatpush1.bf16.msra.mxu0 0
      %441 = vmatprep.subr.bf16.mxu0 0
      %442 = vmatpush1.bf16.msra.mxu0 0
      %443 = vmatprep.subr.bf16.mxu0 0
      %444 = vmatpush1.bf16.msra.mxu0 0
      %445 = vmatprep.subr.bf16.mxu0 0
      %446 = vmatpush1.bf16.msra.mxu0 0
      %447 = vmatprep.subr.bf16.mxu0 0
      %448 = vmatpush1.bf16.msra.mxu0 0
      %449 = vmatprep.subr.bf16.mxu0 0
      %450 = vmatpush1.bf16.msra.mxu0 0
      %451 = vmatprep.subr.bf16.mxu0 0
      %452 = vmatpush1.bf16.msra.mxu0 0
      %453 = vmatprep.subr.bf16.mxu0 0
      %454 = vmatpush1.bf16.msra.mxu0 0
      %455 = vmatprep.subr.bf16.mxu0 0
      %456 = vmatpush1.bf16.msra.mxu0 0
      %457 = vmatprep.subr.bf16.mxu0 0
      %458 = vmatpush1.bf16.msra.mxu0 0
      %459 = vmatprep.subr.bf16.mxu0 0
      %460 = vmatpush1.bf16.msra.mxu0 0
      %461 = vmatprep.mubr.bf16.mxu0 0
      %462 = vmatmul.mubr.bf16.gmra.mrb[0].mxu0 %v427
      %v463 = vpop.f32.mrb[0].mxu0
      %v464 = vadd.f32 0.0, %v463
      %v465 = vpop.f32.mrb[0].mxu0
      %v466 = vpop.f32.mrb[0].mxu0
      %v467 = vadd.f32 0.0, %v466
      %v468 = vpop.f32.mrb[0].mxu0
      %469 = vdwg.mxu0
      %v470 = vmul.f32 %v417, %v464
      %v471 = vmul.f32 %v418, %v467
      %v472 = vld [vmem:[%s4] sm:$0x1]
      %v473 = vunpack.c.l.bf16 %v472
      %475 = vset.pattern.permute.xlu0 0
      %476 = vperm.xlu0 %475, %v470
      %v477 = vpop.permute.xlu0 %476
      %480 = vset.pattern.permute.xlu0 0
      %481 = vperm.xlu0 %480, %v471
      %v482 = vpop.permute.xlu0 %481
      %v484 = vlaneseq
      %v485 = vshrl.u32 %v484, 7
      %v486 = vsub.s32 0, %v485
      %v487 = vrot.slane %v473, %v486
      %v488 = vmul.f32 %v477, %v487
      %v489 = vmul.f32 %v482, %v487
      %v490 = vld [vmem:[%s5] sm:$0x1]
      %v491 = vunpack.c.l.bf16 %v490
      %493 = vset.pattern.permute.xlu0 0
      %494 = vperm.xlu0 %493, %v413
      %v495 = vpop.permute.xlu0 %494
      %498 = vset.pattern.permute.xlu0 0
      %499 = vperm.xlu0 %498, %v414
      %v500 = vpop.permute.xlu0 %499
      %v502 = vlaneseq
      %v503 = vshrl.u32 %v502, 7
      %v504 = vsub.s32 0, %v503
      %v505 = vrot.slane %v491, %v504
      %v506 = vmul.f32 %v495, %v505
      %v507 = vmul.f32 %v500, %v505
      %v508 = vadd.f32 %v488, %v506
      %v509 = vadd.f32 %v489, %v507
      %v510 = vld [vmem:[%s6] sm:$0x1]
      %v512 = vlaneseq
      %v513 = vshrl.u32 %v512, 7
      %v514 = vsub.s32 0, %v513
      %v515 = vrot.slane %v510, %v514
      %v517 = vadd.f32 %v508, %v515
      %v518 = vadd.f32 %v509, %v515
      %v519 = vmax.f32 %v517, 0.0
      %v520 = vmax.f32 %v518, 0.0
      %v521 = vpack.c.bf16 %v520, %v519
      %522 = vmatprep.subr.bf16.mxu0 0
      %523 = vmatpush1.bf16.msra.mxu0 %v521
      %524 = vmatprep.subr.bf16.mxu0 0
      %525 = vmatpush1.bf16.msra.mxu0 0
      %526 = vmatprep.subr.bf16.mxu0 0
      %527 = vmatpush1.bf16.msra.mxu0 0
      %528 = vmatprep.subr.bf16.mxu0 0
      %529 = vmatpush1.bf16.msra.mxu0 0
      %530 = vmatprep.subr.bf16.mxu0 0
      %531 = vmatpush1.bf16.msra.mxu0 0
      %532 = vmatprep.subr.bf16.mxu0 0
      %533 = vmatpush1.bf16.msra.mxu0 0
      %534 = vmatprep.subr.bf16.mxu0 0
      %535 = vmatpush1.bf16.msra.mxu0 0
      %536 = vmatprep.subr.bf16.mxu0 0
      %537 = vmatpush1.bf16.msra.mxu0 0
      %538 = vmatprep.subr.bf16.mxu0 0
      %539 = vmatpush1.bf16.msra.mxu0 0
      %540 = vmatprep.subr.bf16.mxu0 0
      %541 = vmatpush1.bf16.msra.mxu0 0
      %542 = vmatprep.subr.bf16.mxu0 0
      %543 = vmatpush1.bf16.msra.mxu0 0
      %544 = vmatprep.subr.bf16.mxu0 0
      %545 = vmatpush1.bf16.msra.mxu0 0
      %546 = vmatprep.subr.bf16.mxu0 0
      %547 = vmatpush1.bf16.msra.mxu0 0
      %548 = vmatprep.subr.bf16.mxu0 0
      %549 = vmatpush1.bf16.msra.mxu0 0
      %550 = vmatprep.subr.bf16.mxu0 0
      %551 = vmatpush1.bf16.msra.mxu0 0
      %552 = vmatprep.subr.bf16.mxu0 0
      %553 = vmatpush1.bf16.msra.mxu0 0
      %554 = vmatprep.mubr.bf16.mxu0 0
      %555 = vmatmul.mubr.bf16.gmra.mrb[0].mxu0 %v427
      %v556 = vpop.f32.mrb[0].mxu0
      %v557 = vadd.f32 0.0, %v556
      %v558 = vpop.f32.mrb[0].mxu0
      %v559 = vpop.f32.mrb[0].mxu0
      %v560 = vadd.f32 0.0, %v559
      %v561 = vpop.f32.mrb[0].mxu0
      %562 = vdwg.mxu0
      %564 = vset.pattern.permute.xlu0 0
      %565 = vperm.xlu0 %564, %v417
      %v566 = vpop.permute.xlu0 %565
      %569 = vset.pattern.permute.xlu0 0
      %570 = vperm.xlu0 %569, %v418
      %v571 = vpop.permute.xlu0 %570
      %v573 = vmul.f32 %v566, %v557
      %v574 = vmul.f32 %v571, %v560
      %v575 = vpack.c.bf16 %v574, %v573
      %v576 = vld [vmem:[%s7] sm:$0xf]
      %v577 = vld [vmem:[%s7 + $0x4] sm:$0xf]
      %v578 = vld [vmem:[%s8] sm:$0xf]
      %v579 = vld [vmem:[%s8 + $0x4] sm:$0xf]
      %v582 = vunpack.c.l.b16 %v578
      %v583 = vunpack.c.l.b16 %v579
      %v584 = vpack.c.b16 %v583, %v582
      %v587 = vsel %vm425, %v521, 0
      %589 = vmatprep.subr.bf16.mxu0 0
      %590 = vmatpush1.bf16.msra.mxu0 %v584
      %591 = vmatprep.subr.bf16.mxu0 0
      %592 = vmatpush1.bf16.msra.mxu0 0
      %593 = vmatprep.subr.bf16.mxu0 0
      %594 = vmatpush1.bf16.msra.mxu0 0
      %595 = vmatprep.subr.bf16.mxu0 0
      %596 = vmatpush1.bf16.msra.mxu0 0
      %597 = vmatprep.subr.bf16.mxu0 0
      %598 = vmatpush1.bf16.msra.mxu0 0
      %599 = vmatprep.subr.bf16.mxu0 0
      %600 = vmatpush1.bf16.msra.mxu0 0
      %601 = vmatprep.subr.bf16.mxu0 0
      %602 = vmatpush1.bf16.msra.mxu0 0
      %603 = vmatprep.subr.bf16.mxu0 0
      %604 = vmatpush1.bf16.msra.mxu0 0
      %605 = vmatprep.subr.bf16.mxu0 0
      %606 = vmatpush1.bf16.msra.mxu0 0
      %607 = vmatprep.subr.bf16.mxu0 0
      %608 = vmatpush1.bf16.msra.mxu0 0
      %609 = vmatprep.subr.bf16.mxu0 0
      %610 = vmatpush1.bf16.msra.mxu0 0
      %611 = vmatprep.subr.bf16.mxu0 0
      %612 = vmatpush1.bf16.msra.mxu0 0
      %613 = vmatprep.subr.bf16.mxu0 0
      %614 = vmatpush1.bf16.msra.mxu0 0
      %615 = vmatprep.subr.bf16.mxu0 0
      %616 = vmatpush1.bf16.msra.mxu0 0
      %617 = vmatprep.subr.bf16.mxu0 0
      %618 = vmatpush1.bf16.msra.mxu0 0
      %619 = vmatprep.subr.bf16.mxu0 0
      %620 = vmatpush1.bf16.msra.mxu0 0
      %621 = vmatprep.mubr.bf16.mxu0 0
      %622 = vmatmul.mubr.bf16.gmra.mrb[0].mxu0 %v587
      %v623 = vpop.f32.mrb[0].mxu0
      %v624 = vadd.f32 0.0, %v623
      %v625 = vpop.f32.mrb[0].mxu0
      %v626 = vpop.f32.mrb[0].mxu0
      %v627 = vadd.f32 0.0, %v626
      %v628 = vpop.f32.mrb[0].mxu0
      %629 = vdwg.mxu0
      %v632 = vunpack.c.l.b16 %v576
      %v633 = vunpack.c.l.b16 %v577
      %v634 = vpack.c.b16 %v633, %v632
      %v637 = vsel %vm425, %v575, 0
      %639 = vmatprep.subr.bf16.mxu0 0
      %640 = vmatpush1.bf16.msra.mxu0 %v634
      %641 = vmatprep.subr.bf16.mxu0 0
      %642 = vmatpush1.bf16.msra.mxu0 0
      %643 = vmatprep.subr.bf16.mxu0 0
      %644 = vmatpush1.bf16.msra.mxu0 0
      %645 = vmatprep.subr.bf16.mxu0 0
      %646 = vmatpush1.bf16.msra.mxu0 0
      %647 = vmatprep.subr.bf16.mxu0 0
      %648 = vmatpush1.bf16.msra.mxu0 0
      %649 = vmatprep.subr.bf16.mxu0 0
      %650 = vmatpush1.bf16.msra.mxu0 0
      %651 = vmatprep.subr.bf16.mxu0 0
      %652 = vmatpush1.bf16.msra.mxu0 0
      %653 = vmatprep.subr.bf16.mxu0 0
      %654 = vmatpush1.bf16.msra.mxu0 0
      %655 = vmatprep.subr.bf16.mxu0 0
      %656 = vmatpush1.bf16.msra.mxu0 0
      %657 = vmatprep.subr.bf16.mxu0 0
      %658 = vmatpush1.bf16.msra.mxu0 0
      %659 = vmatprep.subr.bf16.mxu0 0
      %660 = vmatpush1.bf16.msra.mxu0 0
      %661 = vmatprep.subr.bf16.mxu0 0
      %662 = vmatpush1.bf16.msra.mxu0 0
      %663 = vmatprep.subr.bf16.mxu0 0
      %664 = vmatpush1.bf16.msra.mxu0 0
      %665 = vmatprep.subr.bf16.mxu0 0
      %666 = vmatpush1.bf16.msra.mxu0 0
      %667 = vmatprep.subr.bf16.mxu0 0
      %668 = vmatpush1.bf16.msra.mxu0 0
      %669 = vmatprep.subr.bf16.mxu0 0
      %670 = vmatpush1.bf16.msra.mxu0 0
      %671 = vmatprep.mubr.bf16.mxu0 0
      %672 = vmatmul.mubr.bf16.gmra.mrb[0].mxu0 %v637
      %v673 = vpop.f32.mrb[0].mxu0
      %v674 = vadd.f32 %v624, %v673
      %v675 = vpop.f32.mrb[0].mxu0
      %v676 = vpop.f32.mrb[0].mxu0
      %v677 = vadd.f32 %v627, %v676
      %v678 = vpop.f32.mrb[0].mxu0
      %679 = vdwg.mxu0
      %v680 = vld [vmem:[%s9] sm:$0x1]
      %v682 = vlaneseq
      %v683 = vshrl.u32 %v682, 7
      %v684 = vsub.s32 0, %v683
      %v685 = vrot.slane %v680, %v684
      %v687 = vadd.f32 %v674, %v685
      %v688 = vadd.f32 %v677, %v685
      %v689 = vld [vmem:[%s407] sm:$0x1]
      %v690 = vpack.c.bf16 %v688, %v687
      %v692 = vsel %vm425, %v689, 0
      %694 = vmatprep.subr.bf16.mxu0 0
      %695 = vmatpush1.bf16.msra.mxu0 %v690
      %696 = vmatprep.subr.bf16.mxu0 0
      %697 = vmatpush1.bf16.msra.mxu0 0
      %698 = vmatprep.subr.bf16.mxu0 0
      %699 = vmatpush1.bf16.msra.mxu0 0
      %700 = vmatprep.subr.bf16.mxu0 0
      %701 = vmatpush1.bf16.msra.mxu0 0
      %702 = vmatprep.subr.bf16.mxu0 0
      %703 = vmatpush1.bf16.msra.mxu0 0
      %704 = vmatprep.subr.bf16.mxu0 0
      %705 = vmatpush1.bf16.msra.mxu0 0
      %706 = vmatprep.subr.bf16.mxu0 0
      %707 = vmatpush1.bf16.msra.mxu0 0
      %708 = vmatprep.subr.bf16.mxu0 0
      %709 = vmatpush1.bf16.msra.mxu0 0
      %710 = vmatprep.subr.bf16.mxu0 0
      %711 = vmatpush1.bf16.msra.mxu0 0
      %712 = vmatprep.subr.bf16.mxu0 0
      %713 = vmatpush1.bf16.msra.mxu0 0
      %714 = vmatprep.subr.bf16.mxu0 0
      %715 = vmatpush1.bf16.msra.mxu0 0
      %716 = vmatprep.subr.bf16.mxu0 0
      %717 = vmatpush1.bf16.msra.mxu0 0
      %718 = vmatprep.subr.bf16.mxu0 0
      %719 = vmatpush1.bf16.msra.mxu0 0
      %720 = vmatprep.subr.bf16.mxu0 0
      %721 = vmatpush1.bf16.msra.mxu0 0
      %722 = vmatprep.subr.bf16.mxu0 0
      %723 = vmatpush1.bf16.msra.mxu0 0
      %724 = vmatprep.subr.bf16.mxu0 0
      %725 = vmatpush1.bf16.msra.mxu0 0
      %726 = vmatprep.mubr.bf16.mxu0 0
      %727 = vmatmul.mubr.bf16.gmra.mrb[0].mxu0 %v692
      %v728 = vpop.f32.mrb[0].mxu0
      %v729 = vadd.f32 0.0, %v728
      %v730 = vpop.f32.mrb[0].mxu0
      %v731 = vpop.f32.mrb[0].mxu0
      %v732 = vpop.f32.mrb[0].mxu0
      %733 = vdwg.mxu0
      %734 = vst [vmem:[%s411] sm:$0x3] %v729
      %p735 = scmp.lt.s32.totalorder %s21, 3
      %s736 = scalar_select %p735, %s21, 3
      %s737 = smul.addr %s736, 2
      %s738 = scalar_lea.vmem %s10, %s737
      // Predicated region
      $region61: #{gnn_critic_forward.1} parent=59 // pred_check
        %p739 = pneg %p269
      $region62: #{gnn_critic_forward.1} parent=59 // pred_check_branch
        %741 = sbr.rel (%p739) target = $region64
      $region63: #{gnn_critic_forward.1} parent=59 // pred_region
        _
      $region64: #{gnn_critic_forward.1} parent=59 // pred_fallthru
        _
    $region60: #{gnn_critic_forward.1} parent=5 // pred_fallthru
      _
    %p742 = scmp.le.s32.totalorder 2, %s16
    // Predicated region
    $region65: #{gnn_critic_forward.1} parent=5 // pred_check
      %p743 = pneg %p742
    $region66: #{gnn_critic_forward.1} parent=5 // pred_check_branch
      %745 = sbr.rel (%p743) target = $region68
    $region67: #{gnn_critic_forward.1} parent=5 // pred_region
      %s746 = ssub.s32 %s16, 2
      // Predicated region
      $region69: #{gnn_critic_forward.1} parent=67 // pred_check
        %p747 = pneg %p275
      $region70: #{gnn_critic_forward.1} parent=67 // pred_check_branch
        %749 = sbr.rel (%p747) target = $region72
      $region71: #{gnn_critic_forward.1} parent=67 // pred_region
        %p750 = scmp.lt.s32.totalorder %s22, 3
        %s751 = scalar_select %p750, %s22, 3
        %s752 = smul.addr %s751, 2
        %s753 = scalar_lea.vmem %s10, %s752
      $region72: #{gnn_critic_forward.1} parent=67 // pred_fallthru
        _
    $region68: #{gnn_critic_forward.1} parent=5 // pred_fallthru
      _
  $region6: #{gnn_critic_forward.1} parent=0 // loop_footer
    %s20 = sadd.s32 1, %s16
  $region7: #{gnn_critic_forward.1} parent=0 // loop_footer_branch
    %15 = sbr.rel target = $region3
  $region8: #{gnn_critic_forward.1} parent=0 // loop_exit
    _

</llo_original>
